<compile_context>
chip_gen: v7x
topology: tpu7x:2x2x1
jax: 0.10.0
libtpu: 0.0.40
codegen_flags: <defaults>
</compile_context>

<pallas_src>
import functools

import jax
import jax.numpy as jnp
from jax.experimental import pallas as pl
from jax.experimental.pallas import tpu as pltpu


def _layernorm_kernel(x_ref, g_ref, o_ref, *, eps, keep_input_dtype):
    # 2D path: x_ref/o_ref (C, T),        g_ref (C, 1)
    # 3D path: x_ref/o_ref (C, S_T, 128), g_ref (C, 1, 1)
    # In both cases the channel reduction is over axis 0 and gamma broadcasts
    # from size-1 trailing dims; OOB spatial lanes/rows of a partial tile only
    # affect their own (masked) outputs, never the reduction.
    x = x_ref[...]
    xf = x.astype(jnp.float32)
    mean = jnp.mean(xf, axis=0, keepdims=True)
    xc = xf - mean                                     # two-pass, numerically safe
    var = jnp.mean(xc * xc, axis=0, keepdims=True)     # biased variance
    inv = jax.lax.rsqrt(var + eps)
    if keep_input_dtype:
        # bf16 on v6e/v7x: halve full-tile temp bytes and VPU element slots.
        o_ref[...] = ((x - mean.astype(x.dtype)) * inv.astype(x.dtype)
                      * g_ref[...].astype(x.dtype)).astype(o_ref.dtype)
    else:
        o_ref[...] = (xc * inv * g_ref[...].astype(jnp.float32)).astype(o_ref.dtype)


def _vmem_budgets():
    """Return (tile_budget_bytes, vmem_limit_bytes), branched per TPU generation."""
    phys = None
    try:
        phys = pltpu.get_tpu_info().vmem_capacity_bytes
    except Exception:
        phys = None
    if phys is not None and phys >= 100 * 1024 * 1024:
        # v5e / v6e: 128 MiB physical VMEM -> big tiles, few grid steps.
        return 48 * 1024 * 1024, 64 * 1024 * 1024
    # v7x (64 MiB VMEM per TC) or unknown: conservative caps, safe everywhere.
    return 24 * 1024 * 1024, 48 * 1024 * 1024


def _keep_input_dtype(dtype):
    if dtype != jnp.bfloat16:
        return False
    try:
        kind = jax.devices()[0].device_kind.lower()
    except Exception:
        return False
    # v4/v5 VPUs have no native bf16 -> keep the all-f32 path there.
    return not ("v4" in kind or "v5" in kind)


def _bytes_per_element(itemsize):
    # x + out blocks, double-buffered, in the input dtype, plus ~2 full-block
    # f32 temporaries live in the kernel body (f32 upcast + centered value).
    return 4 * itemsize + 2 * 4


def _spatial_tile_2d(C, HW, itemsize, budget_bytes, want_two_steps):
    """Largest 128-multiple lane tile that fits the pipelined VMEM budget."""
    per_lane = C * _bytes_per_element(itemsize)
    t = (budget_bytes // per_lane) // 128 * 128
    hw_padded = ((HW + 127) // 128) * 128
    t = max(128, min(t, hw_padded))
    if want_two_steps and t >= hw_padded and hw_padded > 128:
        # Split the only spatial tile so v7x's two TensorCores both get work.
        t = ((hw_padded // 128 + 1) // 2) * 128
    return int(t)


def _spatial_tile_3d(C, S, itemsize, budget_bytes, want_two_steps):
    """Number of 128-lane spatial rows per block (multiple of 8, or full S)."""
    per_row = C * 128 * _bytes_per_element(itemsize)
    s_tile = max(1, budget_bytes // per_row)
    if want_two_steps:
        half = (((S + 1) // 2 + 7) // 8) * 8
        if half < S:
            s_tile = min(s_tile, half)
    if s_tile >= S:
        return int(S)
    return int(max(8, (s_tile // 8) * 8))


def layer_norm_nchw(x, g):
    """x: (N, C, H, W), g: (1, C, 1, 1).  Matches the torch LayerNorm module."""
    N, C, H, W = x.shape
    # Module spec: eps = 1e-5 for float32 inputs, 1e-3 otherwise (this mirrors
    # the custom torch forward exactly; it is NOT nn.LayerNorm's default).
    eps = 1e-5 if x.dtype == jnp.float32 else 1e-3
    HW = H * W
    itemsize = x.dtype.itemsize

    budget, vmem_limit = _vmem_budgets()
    keep = _keep_input_dtype(x.dtype)
    want_two_steps = (N == 1)

    # Sublane tile for this dtype: 8 (4-byte), 16 (2-byte), 32 (1-byte).
    sublane = max(8, 32 // max(1, itemsize))
    use_3d = (HW % 128 == 0) and (C % sublane != 0)

    kernel = functools.partial(_layernorm_kernel, eps=eps, keep_input_dtype=keep)
    params = pltpu.CompilerParams(
        dimension_semantics=("parallel", "parallel"),
        vmem_limit_bytes=vmem_limit,
    )

    if use_3d:
        S = HW // 128
        s_tile = _spatial_tile_3d(C, S, itemsize, budget, want_two_steps)
        x4 = x.reshape(N, C, S, 128)
        g3 = g.reshape(C, 1, 1)
        out4 = pl.pallas_call(
            kernel,
            out_shape=jax.ShapeDtypeStruct((N, C, S, 128), x.dtype),
            grid=(N, pl.cdiv(S, s_tile)),
            in_specs=[
                pl.BlockSpec((None, C, s_tile, 128), lambda n, j: (n, 0, j, 0)),
                # Gamma: constant index_map -> resident, fetched once.
                pl.BlockSpec((C, 1, 1), lambda n, j: (0, 0, 0)),
            ],
            out_specs=pl.BlockSpec((None, C, s_tile, 128), lambda n, j: (n, 0, j, 0)),
            compiler_params=params,
        )(x4, g3)
        return out4.reshape(N, C, H, W)

    T = _spatial_tile_2d(C, HW, itemsize, budget, want_two_steps)
    x3 = x.reshape(N, C, HW)
    g2 = g.reshape(C, 1)
    out3 = pl.pallas_call(
        kernel,
        out_shape=jax.ShapeDtypeStruct((N, C, HW), x.dtype),
        grid=(N, pl.cdiv(HW, T)),
        in_specs=[
            # Full C per block (reduction stays in-block); T lanes of H*W.
            pl.BlockSpec((None, C, T), lambda n, j: (n, 0, j)),
            # Gamma: constant index_map -> resident, fetched once.
            pl.BlockSpec((C, 1), lambda n, j: (0, 0)),
        ],
        out_specs=pl.BlockSpec((None, C, T), lambda n, j: (n, 0, j)),
        compiler_params=params,
    )(x3, g2)
    return out3.reshape(N, C, H, W)


def _reference(x, g):
    eps = 1e-5 if x.dtype == jnp.float32 else 1e-3
    xf = x.astype(jnp.float32)
    mean = jnp.mean(xf, axis=1, keepdims=True)
    var = jnp.mean((xf - mean) ** 2, axis=1, keepdims=True)
    return ((xf - mean) * jax.lax.rsqrt(var + eps) * g.astype(jnp.float32)).astype(x.dtype)


if __name__ == "__main__":
    key = jax.random.PRNGKey(0)
    N, C, H, W = 2, 4, 16, 16
    x = jax.random.normal(key, (N, C, H, W), dtype=jnp.float32)
    # Parameter g: nn.Parameter(torch.ones(1, dim, 1, 1)) -> deterministic ones.
    g = jnp.ones((1, C, 1, 1), dtype=jnp.float32)

    out = jax.block_until_ready(layer_norm_nchw(x, g))

    ref = _reference(x, g)
    assert out.shape == (N, C, H, W)
    assert jnp.allclose(out, ref, atol=1e-5, rtol=1e-5), "mismatch vs reference"
    print("KERNEL_OK")
</pallas_src>

<mosaic_0001>
module attributes {stable_mosaic.version = 11 : i64} {
  func.func @_layernorm_kernel(%arg0: i32, %arg1: i32, %arg2: memref<1x4x2x128xf32, #tpu.memory_space<vmem>>, %arg3: memref<4x1x1xf32, #tpu.memory_space<vmem>>, %arg4: memref<1x4x2x128xf32, #tpu.memory_space<vmem>>) attributes {dimension_semantics = [#tpu.dimension_semantics<parallel>, #tpu.dimension_semantics<parallel>], iteration_bounds = array<i64: 2, 1>, scalar_prefetch = 0 : i64, scratch_operands = 0 : i64, tpu.core_type = #tpu.core_type<tc>, window_params = [{transform_indices = @transform_0, window_bounds = array<i64: 1, 4, 2, 128>}, {pipeline_mode = #tpu.pipeline_mode<synchronous>, transform_indices = @transform_1, window_bounds = array<i64: 4, 1, 1>}, {transform_indices = @transform_2, window_bounds = array<i64: 1, 4, 2, 128>}]} {
    %c0 = arith.constant 0 : index
    %c0_0 = arith.constant 0 : index
    %c0_1 = arith.constant 0 : index
    %c0_2 = arith.constant 0 : index
    %0 = vector.load %arg2[%c0, %c0_0, %c0_1, %c0_2] : memref<1x4x2x128xf32, #tpu.memory_space<vmem>>, vector<1x4x2x128xf32>
    %1 = vector.shape_cast %0 : vector<1x4x2x128xf32> to vector<4x2x128xf32>
    %cst = arith.constant dense<0.000000e+00> : vector<2x128xf32>
    %2 = vector.multi_reduction <add>, %1, %cst [0] : vector<4x2x128xf32> to vector<2x128xf32>
    %3 = vector.shape_cast %2 : vector<2x128xf32> to vector<1x2x128xf32>
    %cst_3 = arith.constant 4.000000e+00 : f32
    %4 = vector.broadcast %cst_3 : f32 to vector<1x2x128xf32>
    %5 = arith.divf %3, %4 : vector<1x2x128xf32>
    %6 = vector.broadcast %5 : vector<1x2x128xf32> to vector<4x2x128xf32>
    %7 = arith.subf %1, %6 : vector<4x2x128xf32>
    %8 = arith.mulf %7, %7 : vector<4x2x128xf32>
    %cst_4 = arith.constant dense<0.000000e+00> : vector<2x128xf32>
    %9 = vector.multi_reduction <add>, %8, %cst_4 [0] : vector<4x2x128xf32> to vector<2x128xf32>
    %10 = vector.shape_cast %9 : vector<2x128xf32> to vector<1x2x128xf32>
    %cst_5 = arith.constant 4.000000e+00 : f32
    %11 = vector.broadcast %cst_5 : f32 to vector<1x2x128xf32>
    %12 = arith.divf %10, %11 : vector<1x2x128xf32>
    %cst_6 = arith.constant 9.99999974E-6 : f32
    %13 = vector.broadcast %cst_6 : f32 to vector<1x2x128xf32>
    %14 = arith.addf %12, %13 : vector<1x2x128xf32>
    %15 = math.rsqrt %14 : vector<1x2x128xf32>
    %16 = vector.broadcast %15 : vector<1x2x128xf32> to vector<4x2x128xf32>
    %17 = arith.mulf %7, %16 : vector<4x2x128xf32>
    %c0_7 = arith.constant 0 : index
    %c0_8 = arith.constant 0 : index
    %c0_9 = arith.constant 0 : index
    %18 = vector.load %arg3[%c0_7, %c0_8, %c0_9] : memref<4x1x1xf32, #tpu.memory_space<vmem>>, vector<4x1x1xf32>
    %19 = vector.broadcast %18 : vector<4x1x1xf32> to vector<4x2x128xf32>
    %20 = arith.mulf %17, %19 : vector<4x2x128xf32>
    %c0_10 = arith.constant 0 : index
    %c0_11 = arith.constant 0 : index
    %c0_12 = arith.constant 0 : index
    %c0_13 = arith.constant 0 : index
    %21 = vector.load %arg4[%c0_10, %c0_11, %c0_12, %c0_13] : memref<1x4x2x128xf32, #tpu.memory_space<vmem>>, vector<1x4x2x128xf32>
    %22 = vector.shape_cast %21 : vector<1x4x2x128xf32> to vector<4x2x128xf32>
    %23 = vector.shape_cast %20 : vector<4x2x128xf32> to vector<1x4x2x128xf32>
    tpu.vector_store %arg4[%c0_10, %c0_11, %c0_12, %c0_13], %23 {strides = array<i32>} : memref<1x4x2x128xf32, #tpu.memory_space<vmem>>, vector<1x4x2x128xf32>,
    return
  }
  func.func @transform_0(%arg0: i32, %arg1: i32) -> (i32, i32, i32, i32) {
    %c0_i32 = arith.constant 0 : i32
    %c0_i32_0 = arith.constant 0 : i32
    %c0_i32_1 = arith.constant 0 : i32
    return %arg0, %c0_i32, %arg1, %c0_i32_0 : i32, i32, i32, i32
  }
  func.func @transform_1(%arg0: i32, %arg1: i32) -> (i32, i32, i32) {
    %c0_i32 = arith.constant 0 : i32
    %c0_i32_0 = arith.constant 0 : i32
    %c0_i32_1 = arith.constant 0 : i32
    %c0_i32_2 = arith.constant 0 : i32
    return %c0_i32, %c0_i32_0, %c0_i32_1 : i32, i32, i32
  }
  func.func @transform_2(%arg0: i32, %arg1: i32) -> (i32, i32, i32, i32) {
    %c0_i32 = arith.constant 0 : i32
    %c0_i32_0 = arith.constant 0 : i32
    %c0_i32_1 = arith.constant 0 : i32
    return %arg0, %c0_i32, %arg1, %c0_i32_0 : i32, i32, i32, i32
  }
}

</mosaic_0001>

<llo_original>
// kernel: tpu_custom_call.1
$region0: #{tpu_custom_call.1}
  #allocation0 [shape = 'u32[]', space=smem, size = 0x4, offset = 0x4, fixed_abs, tag = 'smem constant byte address 0x4 - core index']
  #allocation1 [shape = 'u32[144,128]{1,0:T(1,128)}', space=vmem, size = 0x12000, scoped, tag = 'internal scratch']
  %s0 = inlined_call_operand.hbm [shape: f32[2,4,2,128], index: 0, kind: input, shape index: {}]
  %s1 = inlined_call_operand.vmem [shape: f32[4,1,1], index: 1, kind: input, shape index: {}]
  %s2 = inlined_call_operand.hbm [shape: f32[2,4,2,128], index: 2, kind: output, shape index: {}]
  %s3 = sld [smem:[#allocation0]]
  $region45: #{tpu_custom_call.1} parent=0
    _
  %s5 = ssub.s32 1, %s3
  %s6 = scalar_select 0, %s5, %s3
  $region1: #{tpu_custom_call.1} parent=0
    #allocation2 [shape = 'u8[8192]{0}', space=vmem, size = 0x2000, scoped, tag = 'input window, operand 0']
    #allocation3 [shape = 's32[2]{0}', space=sflag, size = 0x8, scoped, tag = 'scoped memory for tpu_custom_call.1']
    #allocation4 [shape = 's32[2]{0}', space=sflag, size = 0x8, scoped, tag = 'scoped memory for tpu_custom_call.1']
    #allocation5 [shape = 'u8[8192]{0}', space=vmem, size = 0x2000, scoped, tag = 'output window, operand 0']
    %7 = vsyncpa [#allocation3], 0
    %s8 = scalar_lea.sflag [#allocation3], 1
    %9 = vsyncpa %s8, 0
    %10 = vsyncpa [#allocation4], 0
    %s11 = scalar_lea.sflag [#allocation4], 1
    %12 = vsyncpa %s11, 0
    loop: start=0, step=1, limit=4
    $region2: #{tpu_custom_call.1} parent=1 // loop_pre_header
      _
    $region3: #{tpu_custom_call.1} parent=1 // loop_header
      %s14 = sphi 0, %s18
      %p15 = scmp.ge.s32.totalorder %s14, 4
      %s21 = sphi 0, %s33
      %s22 = sphi 0, %s29
      %s23 = sphi 0, %s21
      %s24 = sphi 0, %s22
      %s25 = sphi 0, %s23
      %s26 = sphi 0, %s24
      %s38 = sphi 0, %s40
      %s41 = sphi 0, %s38
      %s42 = sphi 0, %s41
      %s58 = sphi 0, %s42
      %s62 = sphi 0, %s62
      %s64 = sphi 0, %s62
      %s65 = sphi 0, %s64
      %s79 = sphi 0, %s65
      %s87 = sphi 0, %s89
      %s90 = sphi 0, %s87
      %s91 = sphi 0, %s90
      %s107 = sphi 0, %s91
    $region4: #{tpu_custom_call.1} parent=1 // loop_header_branch
      %17 = sbr.rel (%p15) target = $region8
    $region5: #{tpu_custom_call.1} parent=1 // loop_body
      %s19 = ssub.s32 %s14, 1
      %s20 = ssub.s32 %s14, 2
      %s27 = sadd.s32 1, %s22
      %p28 = scmp.ge.s32.totalorder %s27, 1
      %s29 = scalar_select %p28, 0, %s27
      %s30 = sadd.s32 1, %s21
      %s31 = scalar_select %p28, %s30, %s21
      %p32 = scmp.ge.s32.totalorder %s31, 2
      %s33 = scalar_select %p32, 0, %s31
      %s34 = ssub.s32 %s21, %s33
      %s35 = ssub.s32 %s22, %s29
      %s36 = sor.u32 %s34, %s35
      %p37 = scmp.eq.s32.totalorder %s36, 0
      %s39 = sadd.s32 %s38, 1
      %s40 = scalar_select %p37, %s38, %s39
      %p43 = pneg %p37
      %p44 = scmp.eq.s32.totalorder %s14, 1
      %p45 = por %p43, %p44
      %p46 = scmp.ne.s32.totalorder %s38, %s41
      %p47 = scmp.eq.s32.totalorder %s14, 0
      %p48 = por %p46, %p47
      %p49 = scmp.ne.s32.totalorder %s38, %s41
      %p50 = scmp.eq.s32.totalorder %s19, 1
      %p51 = por %p49, %p50
      %p52 = scmp.ne.s32.totalorder %s41, %s42
      %p53 = scmp.eq.s32.totalorder %s19, 0
      %p54 = por %p52, %p53
      %p55 = scmp.ne.s32.totalorder %s41, %s42
      %p56 = scmp.eq.s32.totalorder %s20, 1
      %p57 = por %p55, %p56
      %p59 = scmp.ne.s32.totalorder %s42, %s58
      %p60 = scmp.eq.s32.totalorder %s20, 0
      %p61 = por %p59, %p60
      %s63 = sadd.s32 %s62, 1
      %p66 = scmp.eq.s32.totalorder %s14, 1
      %p67 = scmp.ne.s32.totalorder %s62, %s64
      %p68 = scmp.eq.s32.totalorder %s14, 0
      %p69 = por %p67, %p68
      %p70 = scmp.ne.s32.totalorder %s62, %s64
      %p71 = scmp.eq.s32.totalorder %s19, 1
      %p72 = por %p70, %p71
      %p73 = scmp.ne.s32.totalorder %s64, %s65
      %p74 = scmp.eq.s32.totalorder %s19, 0
      %p75 = por %p73, %p74
      %p76 = scmp.ne.s32.totalorder %s64, %s65
      %p77 = scmp.eq.s32.totalorder %s20, 1
      %p78 = por %p76, %p77
      %p80 = scmp.ne.s32.totalorder %s65, %s79
      %p81 = scmp.eq.s32.totalorder %s20, 0
      %p82 = por %p80, %p81
      %s83 = ssub.s32 %s21, %s33
      %s84 = ssub.s32 %s22, %s29
      %s85 = sor.u32 %s83, %s84
      %p86 = scmp.eq.s32.totalorder %s85, 0
      %s88 = sadd.s32 %s87, 1
      %s89 = scalar_select %p86, %s87, %s88
      %p92 = pneg %p86
      %p93 = scmp.eq.s32.totalorder %s14, 1
      %p94 = por %p92, %p93
      %p95 = scmp.ne.s32.totalorder %s87, %s90
      %p96 = scmp.eq.s32.totalorder %s14, 0
      %p97 = por %p95, %p96
      %p98 = scmp.ne.s32.totalorder %s87, %s90
      %p99 = scmp.eq.s32.totalorder %s19, 1
      %p100 = por %p98, %p99
      %p101 = scmp.ne.s32.totalorder %s90, %s91
      %p102 = scmp.eq.s32.totalorder %s19, 0
      %p103 = por %p101, %p102
      %p104 = scmp.ne.s32.totalorder %s90, %s91
      %p105 = scmp.eq.s32.totalorder %s20, 1
      %p106 = por %p104, %p105
      %p108 = scmp.ne.s32.totalorder %s91, %s107
      %p109 = scmp.eq.s32.totalorder %s20, 0
      %p110 = por %p108, %p109
      %p111 = scmp.le.s32.totalorder 1, %s14
      %p112 = scmp.lt.s32.totalorder %s14, 3
      %p113 = pnand %p111, %p112
      %p114 = pneg %p113
      // Predicated region
      $region9: #{tpu_custom_call.1} parent=5 // pred_check
        _
      $region10: #{tpu_custom_call.1} parent=5 // pred_check_branch
        %116 = sbr.rel (%p113) target = $region12
      $region11: #{tpu_custom_call.1} parent=5 // pred_region
        %s117 = ssub.s32 %s14, 1
        // Predicated region
        $region13: #{tpu_custom_call.1} parent=11 // pred_check
          %p118 = pneg %p75
        $region14: #{tpu_custom_call.1} parent=11 // pred_check_branch
          %120 = sbr.rel (%p118) target = $region16
        $region15: #{tpu_custom_call.1} parent=11 // pred_region
          _
        $region16: #{tpu_custom_call.1} parent=11 // pred_fallthru
          _
      $region12: #{tpu_custom_call.1} parent=5 // pred_fallthru
        _
      %p121 = scmp.lt.s32.totalorder %s14, 2
      // Predicated region
      $region17: #{tpu_custom_call.1} parent=5 // pred_check
        %p122 = pneg %p121
      $region18: #{tpu_custom_call.1} parent=5 // pred_check_branch
        %124 = sbr.rel (%p122) target = $region20
      $region19: #{tpu_custom_call.1} parent=5 // pred_region
        // Predicated region
        $region21: #{tpu_custom_call.1} parent=19 // pred_check
          %p125 = pneg %p48
        $region22: #{tpu_custom_call.1} parent=19 // pred_check_branch
          %127 = sbr.rel (%p125) target = $region24
        $region23: #{tpu_custom_call.1} parent=19 // pred_region
          %s128 = sand.u32 %s38, 1
          %s129 = scalar_lea.sflag [#allocation3], %s128
          %s130 = sand.u32 %s38, 1
          %s131 = smul.addr %s130, 8
          %s132 = scalar_lea.vmem [#allocation2], %s131
          %s134 = ssub.s32 128, 128
          %135 = vsyncadd %s129, %s134
          %s136 = smul.addr %s21, 4
          %s137 = sadd.s32 %s22, %s136
          %s138 = smul.addr %s137, 32
          %s139 = scalar_lea.hbm %s0, %s138
          %s140 = sshll.u32 %s132, 4
          %s141 = int_to_ptr.vmem [resolvable:$true] %s140
          %146 = dma.hbm_to_vmem [thread:$0]  %s139, 128, %s141, %s129, 32, 32, 2
        $region24: #{tpu_custom_call.1} parent=19 // pred_fallthru
          _
      $region20: #{tpu_custom_call.1} parent=5 // pred_fallthru
        _
      %p147 = scmp.le.s32.totalorder 1, %s14
      %p148 = scmp.lt.s32.totalorder %s14, 3
      %p149 = pnand %p147, %p148
      %p150 = pneg %p149
      // Predicated region
      $region25: #{tpu_custom_call.1} parent=5 // pred_check
        _
      $region26: #{tpu_custom_call.1} parent=5 // pred_check_branch
        %152 = sbr.rel (%p149) target = $region28
      $region27: #{tpu_custom_call.1} parent=5 // pred_region
        %s153 = ssub.s32 %s14, 1
        %s154 = sand.u32 %s41, 1
        %s155 = scalar_lea.sflag [#allocation3], %s154
        %s156 = sand.u32 %s41, 1
        %s157 = smul.addr %s156, 8
        %s158 = scalar_lea.vmem [#allocation2], %s157
        // Predicated region
        $region29: #{tpu_custom_call.1} parent=27 // pred_check
          %p159 = pneg %p54
        $region30: #{tpu_custom_call.1} parent=27 // pred_check_branch
          %161 = sbr.rel (%p159) target = $region32
        $region31: #{tpu_custom_call.1} parent=27 // pred_region
          %162 = dma.done %s155, 128
        $region32: #{tpu_custom_call.1} parent=27 // pred_fallthru
          _
        %s163 = sand.u32 %s41, 1
        %s164 = scalar_lea.sflag [#allocation3], %s163
        %s165 = sand.u32 %s41, 1
        %s166 = smul.addr %s165, 8
        %s167 = scalar_lea.vmem [#allocation2], %s166
        %p168 = pneg %p54
        %p169 = pneg %p51
        %p170 = pneg %p75
        %p171 = pneg %p72
        %p172 = pneg %p103
        %p173 = pneg %p100
        %s174 = sand.u32 %s90, 1
        %s175 = scalar_lea.sflag [#allocation4], %s174
        %s176 = sand.u32 %s90, 1
        %s177 = smul.addr %s176, 8
        %s178 = scalar_lea.vmem [#allocation5], %s177
        %v179 = vld [vmem:[%s158] sm:$0x3]
        %v180 = vld [vmem:[%s158 + $0x2] sm:$0x3]
        %v181 = vld [vmem:[%s158 + $0x4] sm:$0x3]
        %v182 = vld [vmem:[%s158 + $0x6] sm:$0x3]
        %vm183 = vcmask 1041408
        %v184 = vsel %vm183, %v179, 0.0
        %v185 = vsel %vm183, %v180, 0.0
        %v186 = vadd.f32 %v184, %v185
        %v187 = vsel %vm183, %v181, 0.0
        %v188 = vadd.f32 %v186, %v187
        %v189 = vsel %vm183, %v182, 0.0
        %v190 = vadd.f32 %v188, %v189
        %v191 = vrcp.pop 4.0
        %v192 = vmul.f32 %v190, %v191
        %v193 = vsub.f32 %v179, %v192
        %v194 = vsub.f32 %v180, %v192
        %v195 = vsub.f32 %v181, %v192
        %v196 = vsub.f32 %v182, %v192
        %v197 = vmul.f32 %v193, %v193
        %v198 = vmul.f32 %v194, %v194
        %v199 = vmul.f32 %v195, %v195
        %v200 = vmul.f32 %v196, %v196
        %v201 = vsel %vm183, %v197, 0.0
        %v202 = vsel %vm183, %v198, 0.0
        %v203 = vadd.f32 %v201, %v202
        %v204 = vsel %vm183, %v199, 0.0
        %v205 = vadd.f32 %v203, %v204
        %v206 = vsel %vm183, %v200, 0.0
        %v207 = vadd.f32 %v205, %v206
        %v208 = vmul.f32 %v207, %v191
        %v209 = vadd.f32 %v208, 1e-05
        %v210 = vrsqrt.pop %v209
        %v211 = vmul.f32 %v193, %v210
        %v212 = vmul.f32 %v194, %v210
        %v213 = vmul.f32 %v195, %v210
        %v214 = vmul.f32 %v196, %v210
        %v215 = vld [vmem:[%s1] sm:$0x1]
        %v216 = vld [vmem:[%s1 + $0x1] sm:$0x1]
        %v217 = vld [vmem:[%s1 + $0x2] sm:$0x1]
        %v218 = vld [vmem:[%s1 + $0x3] sm:$0x1]
        %v223 = vlaneseq
        %v224 = vshrl.u32 %v223, 7
        %v225 = vsub.s32 0, %v224
        %v226 = vrot.slane %v215, %v225
        %v227 = vlaneseq
        %v228 = vshrl.u32 %v227, 7
        %v229 = vsub.s32 0, %v228
        %v230 = vrot.slane %v216, %v229
        %v231 = vlaneseq
        %v232 = vshrl.u32 %v231, 7
        %v233 = vsub.s32 0, %v232
        %v234 = vrot.slane %v217, %v233
        %v235 = vlaneseq
        %v236 = vshrl.u32 %v235, 7
        %v237 = vsub.s32 0, %v236
        %v238 = vrot.slane %v218, %v237
        %239 = vset.pattern.permute.xlu0 0
        %240 = vperm.xlu0 %239, %v226
        %v241 = vpop.permute.xlu0 %240
        %243 = vset.pattern.permute.xlu0 0
        %244 = vperm.xlu0 %243, %v230
        %v245 = vpop.permute.xlu0 %244
        %247 = vset.pattern.permute.xlu0 0
        %248 = vperm.xlu0 %247, %v234
        %v249 = vpop.permute.xlu0 %248
        %251 = vset.pattern.permute.xlu0 0
        %252 = vperm.xlu0 %251, %v238
        %v253 = vpop.permute.xlu0 %252
        %v255 = vmul.f32 %v211, %v241
        %v256 = vmul.f32 %v212, %v245
        %v257 = vmul.f32 %v213, %v249
        %v258 = vmul.f32 %v214, %v253
        %259 = vst [vmem:[%s178] sm:$0x3] %v255
        %260 = vst [vmem:[%s178 + $0x2] sm:$0x3] %v256
        %261 = vst [vmem:[%s178 + $0x4] sm:$0x3] %v257
        %262 = vst [vmem:[%s178 + $0x6] sm:$0x3] %v258
        %s263 = sand.u32 %s90, 1
        %s264 = scalar_lea.sflag [#allocation4], %s263
        %s265 = sand.u32 %s90, 1
        %s266 = smul.addr %s265, 8
        %s267 = scalar_lea.vmem [#allocation5], %s266
        // Predicated region
        $region33: #{tpu_custom_call.1} parent=27 // pred_check
          %p268 = pneg %p100
        $region34: #{tpu_custom_call.1} parent=27 // pred_check_branch
          %270 = sbr.rel (%p268) target = $region36
        $region35: #{tpu_custom_call.1} parent=27 // pred_region
          %s272 = ssub.s32 128, 128
          %273 = vsyncadd %s264, %s272
          %s274 = smul.addr %s23, 4
          %s275 = sadd.s32 %s24, %s274
          %s276 = smul.addr %s275, 32
          %s277 = scalar_lea.hbm %s2, %s276
          %s278 = sshll.u32 %s267, 4
          %s279 = int_to_ptr.vmem [resolvable:$true] %s278
          %284 = dma.vmem_to_hbm [thread:$0]  %s279, 128, %s277, %s264, 32, 32, 2
        $region36: #{tpu_custom_call.1} parent=27 // pred_fallthru
          _
      $region28: #{tpu_custom_call.1} parent=5 // pred_fallthru
        _
      %p285 = scmp.le.s32.totalorder 2, %s14
      // Predicated region
      $region37: #{tpu_custom_call.1} parent=5 // pred_check
        %p286 = pneg %p285
      $region38: #{tpu_custom_call.1} parent=5 // pred_check_branch
        %288 = sbr.rel (%p286) target = $region40
      $region39: #{tpu_custom_call.1} parent=5 // pred_region
        %s289 = ssub.s32 %s14, 2
        // Predicated region
        $region41: #{tpu_custom_call.1} parent=39 // pred_check
          %p290 = pneg %p106
        $region42: #{tpu_custom_call.1} parent=39 // pred_check_branch
          %292 = sbr.rel (%p290) target = $region44
        $region43: #{tpu_custom_call.1} parent=39 // pred_region
          %s293 = sand.u32 %s91, 1
          %s294 = scalar_lea.sflag [#allocation4], %s293
          %s295 = sand.u32 %s91, 1
          %s296 = smul.addr %s295, 8
          %s297 = scalar_lea.vmem [#allocation5], %s296
          %298 = dma.done %s294, 128
        $region44: #{tpu_custom_call.1} parent=39 // pred_fallthru
          _
      $region40: #{tpu_custom_call.1} parent=5 // pred_fallthru
        _
    $region6: #{tpu_custom_call.1} parent=1 // loop_footer
      %s18 = sadd.s32 1, %s14
    $region7: #{tpu_custom_call.1} parent=1 // loop_footer_branch
      %13 = sbr.rel target = $region3
    $region8: #{tpu_custom_call.1} parent=1 // loop_exit
      _
    %299 = vsyncpa [#allocation3], 1
    %s300 = scalar_lea.sflag [#allocation3], 1
    %301 = vsyncpa %s300, 1
    %302 = vsyncpa [#allocation4], 1
    %s303 = scalar_lea.sflag [#allocation4], 1
    %304 = vsyncpa %s303, 1

</llo_original>
